<compile_context>
chip_gen: v7x
topology: tpu7x:2x2x1
jax: 0.10.0
libtpu: 0.0.40
codegen_flags: <defaults>
</compile_context>

<pallas_src>
import jax
import jax.numpy as jnp
from jax.experimental import pallas as pl
from jax.experimental.pallas import tpu as pltpu

# Layer sizes of the DQN MLP.
D_IN, D_H1, D_H2, D_OUT = 5, 84, 50, 13
_TB_MAX = 1024  # batch tile on the lane dimension; sweep 512/1024/2048 if needed.


def dqn_kernel(x_ref, w1_ref, b1_ref, w2_ref, b2_ref, w3_ref, b3_ref, out_ref):
    # x_ref: [5, TB]; w*: [out, in]; b*: [out, 1]; out_ref: [13, TB].
    x = x_ref[...]
    # fc1 + ReLU
    h1 = jnp.dot(w1_ref[...], x, preferred_element_type=jnp.float32) + b1_ref[...]
    h1 = jnp.maximum(h1, 0.0)
    # fc2 + ReLU
    h2 = jnp.dot(w2_ref[...], h1, preferred_element_type=jnp.float32) + b2_ref[...]
    h2 = jnp.maximum(h2, 0.0)
    # fc3 (no activation)
    out_ref[...] = (
        jnp.dot(w3_ref[...], h2, preferred_element_type=jnp.float32) + b3_ref[...]
    )


def _round_up(n, m):
    return ((n + m - 1) // m) * m


def dqn_forward(x, params):
    """Forward pass. x: any shape whose total size is divisible by 5
    (matches torch's x.view(-1, 5)). Returns [B, 13] float32."""
    w1, b1, w2, b2, w3, b3 = params
    x2d = jnp.reshape(x, (-1, D_IN)).astype(jnp.float32)
    b = x2d.shape[0]

    # Batch goes on the lane (last) dim -> pad to a multiple of the tile.
    tb = min(_TB_MAX, _round_up(b, 128))
    b_pad = _round_up(b, tb)
    xt = jnp.transpose(x2d)  # [5, B]
    if b_pad != b:
        xt = jnp.pad(xt, ((0, 0), (0, b_pad - b)))

    grid = (b_pad // tb,)
    resident = lambda i: (0, 0)   # weights / biases: same block every step -> stay in VMEM
    batch_blk = lambda i: (0, i)  # stream batch tiles along the lane dim

    flops = 2 * b_pad * (D_IN * D_H1 + D_H1 * D_H2 + D_H2 * D_OUT)
    w_bytes = 4 * (D_IN * D_H1 + D_H1 + D_H1 * D_H2 + D_H2 + D_H2 * D_OUT + D_OUT)
    bytes_accessed = 4 * b_pad * (D_IN + D_OUT) + w_bytes

    out_t = pl.pallas_call(
        dqn_kernel,
        out_shape=jax.ShapeDtypeStruct((D_OUT, b_pad), jnp.float32),
        grid=grid,
        in_specs=[
            pl.BlockSpec((D_IN, tb), batch_blk),     # x  [5, TB]
            pl.BlockSpec((D_H1, D_IN), resident),    # w1 [84, 5]
            pl.BlockSpec((D_H1, 1), resident),       # b1 [84, 1]
            pl.BlockSpec((D_H2, D_H1), resident),    # w2 [50, 84]
            pl.BlockSpec((D_H2, 1), resident),       # b2 [50, 1]
            pl.BlockSpec((D_OUT, D_H2), resident),   # w3 [13, 50]
            pl.BlockSpec((D_OUT, 1), resident),      # b3 [13, 1]
        ],
        out_specs=pl.BlockSpec((D_OUT, tb), batch_blk),
        compiler_params=pltpu.CompilerParams(
            dimension_semantics=("parallel",),
        ),
        cost_estimate=pl.CostEstimate(
            flops=flops, transcendentals=0, bytes_accessed=bytes_accessed
        ),
    )(xt, w1, b1, w2, b2, w3, b3)

    # Slice off padding and return batch-major [B, 13] (layout plumbing in XLA).
    return jnp.transpose(out_t[:, :b])


def init_params(key):
    """Deterministic init matching nn.Linear's U(-1/sqrt(fan_in), 1/sqrt(fan_in)).
    Weights are kept in PyTorch-native [out, in] layout; biases are [out, 1]."""
    dims = [(D_H1, D_IN), (D_H2, D_H1), (D_OUT, D_H2)]
    params = []
    for i, (fan_out, fan_in) in enumerate(dims):
        kw, kb = jax.random.split(jax.random.fold_in(key, i))
        bound = 1.0 / jnp.sqrt(jnp.float32(fan_in))
        w = jax.random.uniform(
            kw, (fan_out, fan_in), jnp.float32, minval=-bound, maxval=bound
        )
        bvec = jax.random.uniform(
            kb, (fan_out, 1), jnp.float32, minval=-bound, maxval=bound
        )
        params += [w, bvec]
    return tuple(params)


if __name__ == "__main__":
    key = jax.random.PRNGKey(0)
    k_params, k_x = jax.random.split(key)
    params = init_params(k_params)

    # Small example input: batch of 8 state vectors of size 5.
    x = jax.random.normal(k_x, (8, 5), dtype=jnp.float32)

    out = dqn_forward(x, params)
    out = jax.block_until_ready(out)

    # Pure-JAX reference of the same math (weights are [out, in], biases [out, 1]).
    w1, b1, w2, b2, w3, b3 = params
    h = jnp.maximum(x @ w1.T + b1.T, 0.0)
    h = jnp.maximum(h @ w2.T + b2.T, 0.0)
    ref = h @ w3.T + b3.T

    assert out.shape == (8, 13)
    assert jnp.allclose(out, ref, atol=1e-5, rtol=1e-5)

    print("KERNEL_OK")
</pallas_src>

<mosaic_0001>
module attributes {stable_mosaic.version = 11 : i64} {
  func.func @dqn_kernel(%arg0: i32, %arg1: memref<5x128xf32, #tpu.memory_space<vmem>>, %arg2: memref<84x5xf32, #tpu.memory_space<vmem>>, %arg3: memref<84x1xf32, #tpu.memory_space<vmem>>, %arg4: memref<50x84xf32, #tpu.memory_space<vmem>>, %arg5: memref<50x1xf32, #tpu.memory_space<vmem>>, %arg6: memref<13x50xf32, #tpu.memory_space<vmem>>, %arg7: memref<13x1xf32, #tpu.memory_space<vmem>>, %arg8: memref<13x128xf32, #tpu.memory_space<vmem>>) attributes {dimension_semantics = [#tpu.dimension_semantics<parallel>], iteration_bounds = array<i64: 1>, scalar_prefetch = 0 : i64, scratch_operands = 0 : i64, tpu.core_type = #tpu.core_type<tc>, window_params = [{transform_indices = @transform_0, window_bounds = array<i64: 5, 128>}, {pipeline_mode = #tpu.pipeline_mode<synchronous>, transform_indices = @transform_1, window_bounds = array<i64: 84, 5>}, {pipeline_mode = #tpu.pipeline_mode<synchronous>, transform_indices = @transform_2, window_bounds = array<i64: 84, 1>}, {pipeline_mode = #tpu.pipeline_mode<synchronous>, transform_indices = @transform_3, window_bounds = array<i64: 50, 84>}, {pipeline_mode = #tpu.pipeline_mode<synchronous>, transform_indices = @transform_4, window_bounds = array<i64: 50, 1>}, {pipeline_mode = #tpu.pipeline_mode<synchronous>, transform_indices = @transform_5, window_bounds = array<i64: 13, 50>}, {pipeline_mode = #tpu.pipeline_mode<synchronous>, transform_indices = @transform_6, window_bounds = array<i64: 13, 1>}, {transform_indices = @transform_7, window_bounds = array<i64: 13, 128>}]} {
    %c0 = arith.constant 0 : index
    %c0_0 = arith.constant 0 : index
    %0 = vector.load %arg1[%c0, %c0_0] : memref<5x128xf32, #tpu.memory_space<vmem>>, vector<5x128xf32>
    %c0_1 = arith.constant 0 : index
    %c0_2 = arith.constant 0 : index
    %1 = vector.load %arg2[%c0_1, %c0_2] : memref<84x5xf32, #tpu.memory_space<vmem>>, vector<84x5xf32>
    %cst = arith.constant dense<0.000000e+00> : vector<84x128xf32>
    %2 = tpu.matmul %1, %0, %cst {dimension_numbers = #tpu.dot_dimension_numbers<[1], [0], [0], [1], [0, 0, 1, 1], [], []>} : vector<84x5xf32>, vector<5x128xf32>, vector<84x128xf32> -> vector<84x128xf32>
    %c0_3 = arith.constant 0 : index
    %c0_4 = arith.constant 0 : index
    %3 = vector.load %arg3[%c0_3, %c0_4] : memref<84x1xf32, #tpu.memory_space<vmem>>, vector<84x1xf32>
    %4 = vector.broadcast %3 : vector<84x1xf32> to vector<84x128xf32>
    %5 = arith.addf %2, %4 : vector<84x128xf32>
    %cst_5 = arith.constant 0.000000e+00 : f32
    %6 = vector.broadcast %cst_5 : f32 to vector<84x128xf32>
    %7 = arith.maximumf %5, %6 : vector<84x128xf32>
    %c0_6 = arith.constant 0 : index
    %c0_7 = arith.constant 0 : index
    %8 = vector.load %arg4[%c0_6, %c0_7] : memref<50x84xf32, #tpu.memory_space<vmem>>, vector<50x84xf32>
    %cst_8 = arith.constant dense<0.000000e+00> : vector<50x128xf32>
    %9 = tpu.matmul %8, %7, %cst_8 {dimension_numbers = #tpu.dot_dimension_numbers<[1], [0], [0], [1], [0, 0, 1, 1], [], []>} : vector<50x84xf32>, vector<84x128xf32>, vector<50x128xf32> -> vector<50x128xf32>
    %c0_9 = arith.constant 0 : index
    %c0_10 = arith.constant 0 : index
    %10 = vector.load %arg5[%c0_9, %c0_10] : memref<50x1xf32, #tpu.memory_space<vmem>>, vector<50x1xf32>
    %11 = vector.broadcast %10 : vector<50x1xf32> to vector<50x128xf32>
    %12 = arith.addf %9, %11 : vector<50x128xf32>
    %cst_11 = arith.constant 0.000000e+00 : f32
    %13 = vector.broadcast %cst_11 : f32 to vector<50x128xf32>
    %14 = arith.maximumf %12, %13 : vector<50x128xf32>
    %c0_12 = arith.constant 0 : index
    %c0_13 = arith.constant 0 : index
    %15 = vector.load %arg6[%c0_12, %c0_13] : memref<13x50xf32, #tpu.memory_space<vmem>>, vector<13x50xf32>
    %cst_14 = arith.constant dense<0.000000e+00> : vector<13x128xf32>
    %16 = tpu.matmul %15, %14, %cst_14 {dimension_numbers = #tpu.dot_dimension_numbers<[1], [0], [0], [1], [0, 0, 1, 1], [], []>} : vector<13x50xf32>, vector<50x128xf32>, vector<13x128xf32> -> vector<13x128xf32>
    %c0_15 = arith.constant 0 : index
    %c0_16 = arith.constant 0 : index
    %17 = vector.load %arg7[%c0_15, %c0_16] : memref<13x1xf32, #tpu.memory_space<vmem>>, vector<13x1xf32>
    %18 = vector.broadcast %17 : vector<13x1xf32> to vector<13x128xf32>
    %19 = arith.addf %16, %18 : vector<13x128xf32>
    %c0_17 = arith.constant 0 : index
    %c0_18 = arith.constant 0 : index
    %20 = vector.load %arg8[%c0_17, %c0_18] : memref<13x128xf32, #tpu.memory_space<vmem>>, vector<13x128xf32>
    tpu.vector_store %arg8[%c0_17, %c0_18], %19 {strides = array<i32>} : memref<13x128xf32, #tpu.memory_space<vmem>>, vector<13x128xf32>,
    return
  }
  func.func @transform_0(%arg0: i32) -> (i32, i32) {
    %c0_i32 = arith.constant 0 : i32
    %c0_i32_0 = arith.constant 0 : i32
    return %c0_i32, %arg0 : i32, i32
  }
  func.func @transform_1(%arg0: i32) -> (i32, i32) {
    %c0_i32 = arith.constant 0 : i32
    %c0_i32_0 = arith.constant 0 : i32
    %c0_i32_1 = arith.constant 0 : i32
    return %c0_i32, %c0_i32_0 : i32, i32
  }
  func.func @transform_2(%arg0: i32) -> (i32, i32) {
    %c0_i32 = arith.constant 0 : i32
    %c0_i32_0 = arith.constant 0 : i32
    %c0_i32_1 = arith.constant 0 : i32
    return %c0_i32, %c0_i32_0 : i32, i32
  }
  func.func @transform_3(%arg0: i32) -> (i32, i32) {
    %c0_i32 = arith.constant 0 : i32
    %c0_i32_0 = arith.constant 0 : i32
    %c0_i32_1 = arith.constant 0 : i32
    return %c0_i32, %c0_i32_0 : i32, i32
  }
  func.func @transform_4(%arg0: i32) -> (i32, i32) {
    %c0_i32 = arith.constant 0 : i32
    %c0_i32_0 = arith.constant 0 : i32
    %c0_i32_1 = arith.constant 0 : i32
    return %c0_i32, %c0_i32_0 : i32, i32
  }
  func.func @transform_5(%arg0: i32) -> (i32, i32) {
    %c0_i32 = arith.constant 0 : i32
    %c0_i32_0 = arith.constant 0 : i32
    %c0_i32_1 = arith.constant 0 : i32
    return %c0_i32, %c0_i32_0 : i32, i32
  }
  func.func @transform_6(%arg0: i32) -> (i32, i32) {
    %c0_i32 = arith.constant 0 : i32
    %c0_i32_0 = arith.constant 0 : i32
    %c0_i32_1 = arith.constant 0 : i32
    return %c0_i32, %c0_i32_0 : i32, i32
  }
  func.func @transform_7(%arg0: i32) -> (i32, i32) {
    %c0_i32 = arith.constant 0 : i32
    %c0_i32_0 = arith.constant 0 : i32
    return %c0_i32, %arg0 : i32, i32
  }
}

</mosaic_0001>

<llo_original>
// kernel: tpu_custom_call.1
$region0: #{tpu_custom_call.1}
  #allocation0 [shape = 'u32[]', space=smem, size = 0x4, offset = 0x4, fixed_abs, tag = 'smem constant byte address 0x4 - core index']
  #allocation1 [shape = 'u32[144,128]{1,0:T(1,128)}', space=vmem, size = 0x12000, scoped, tag = 'internal scratch']
  %s0 = inlined_call_operand.vmem [shape: f32[5,128], index: 0, kind: input, shape index: {}]
  %s1 = inlined_call_operand.vmem [shape: f32[84,5], index: 1, kind: input, shape index: {}]
  %s2 = inlined_call_operand.vmem [shape: f32[84,1], index: 2, kind: input, shape index: {}]
  %s3 = inlined_call_operand.vmem [shape: f32[50,84], index: 3, kind: input, shape index: {}]
  %s4 = inlined_call_operand.vmem [shape: f32[50,1], index: 4, kind: input, shape index: {}]
  %s5 = inlined_call_operand.vmem [shape: f32[13,50], index: 5, kind: input, shape index: {}]
  %s6 = inlined_call_operand.vmem [shape: f32[13,1], index: 6, kind: input, shape index: {}]
  %s7 = inlined_call_operand.hbm [shape: f32[13,128], index: 7, kind: output, shape index: {}]
  %s8 = sld [smem:[#allocation0]]
  $region38: #{tpu_custom_call.1} parent=0
    _
  %s10 = ssub.s32 1, %s8
  %s11 = scalar_select 0, %s10, %s8
  $region1: #{tpu_custom_call.1} parent=0
    #allocation2 [shape = 'u8[8192]{0}', space=vmem, size = 0x2000, scoped, tag = 'output window, operand 0, single buffered']
    #allocation3 [shape = 's32[1]{0}', space=sflag, size = 0x4, scoped, tag = 'scoped memory for tpu_custom_call.1']
    %12 = vsyncpa [#allocation3], 0
    // Predicated region
    $region2: #{tpu_custom_call.1} parent=1 // pred_check
      _
    $region3: #{tpu_custom_call.1} parent=1 // pred_check_branch
      %14 = sbr.rel (0) target = $region5
    $region4: #{tpu_custom_call.1} parent=1 // pred_region
      _
    $region5: #{tpu_custom_call.1} parent=1 // pred_fallthru
      _
    // Predicated region
    $region6: #{tpu_custom_call.1} parent=1 // pred_check
      _
    $region7: #{tpu_custom_call.1} parent=1 // pred_check_branch
      %16 = sbr.rel (0) target = $region9
    $region8: #{tpu_custom_call.1} parent=1 // pred_region
      _
    $region9: #{tpu_custom_call.1} parent=1 // pred_fallthru
      _
    // Predicated region
    $region10: #{tpu_custom_call.1} parent=1 // pred_check
      _
    $region11: #{tpu_custom_call.1} parent=1 // pred_check_branch
      %18 = sbr.rel (0) target = $region13
    $region12: #{tpu_custom_call.1} parent=1 // pred_region
      _
    $region13: #{tpu_custom_call.1} parent=1 // pred_fallthru
      _
    // Predicated region
    $region14: #{tpu_custom_call.1} parent=1 // pred_check
      _
    $region15: #{tpu_custom_call.1} parent=1 // pred_check_branch
      %20 = sbr.rel (0) target = $region17
    $region16: #{tpu_custom_call.1} parent=1 // pred_region
      _
    $region17: #{tpu_custom_call.1} parent=1 // pred_fallthru
      _
    // Predicated region
    $region18: #{tpu_custom_call.1} parent=1 // pred_check
      _
    $region19: #{tpu_custom_call.1} parent=1 // pred_check_branch
      %22 = sbr.rel (0) target = $region21
    $region20: #{tpu_custom_call.1} parent=1 // pred_region
      _
    $region21: #{tpu_custom_call.1} parent=1 // pred_fallthru
      _
    // Predicated region
    $region22: #{tpu_custom_call.1} parent=1 // pred_check
      _
    $region23: #{tpu_custom_call.1} parent=1 // pred_check_branch
      %24 = sbr.rel (0) target = $region25
    $region24: #{tpu_custom_call.1} parent=1 // pred_region
      _
    $region25: #{tpu_custom_call.1} parent=1 // pred_fallthru
      _
    // Predicated region
    $region26: #{tpu_custom_call.1} parent=1 // pred_check
      _
    $region27: #{tpu_custom_call.1} parent=1 // pred_check_branch
      %26 = sbr.rel (0) target = $region29
    $region28: #{tpu_custom_call.1} parent=1 // pred_region
      _
    $region29: #{tpu_custom_call.1} parent=1 // pred_fallthru
      _
    %v27 = vld [vmem:[%s0] sm:$0x1f]
    %v28 = vld [vmem:[%s1] sm:$0xff]
    %v29 = vld [vmem:[%s1 + $0x8] sm:$0xff]
    %v30 = vld [vmem:[%s1 + $0x10] sm:$0xff]
    %v31 = vld [vmem:[%s1 + $0x18] sm:$0xff]
    %v32 = vld [vmem:[%s1 + $0x20] sm:$0xff]
    %v33 = vld [vmem:[%s1 + $0x28] sm:$0xff]
    %v34 = vld [vmem:[%s1 + $0x30] sm:$0xff]
    %v35 = vld [vmem:[%s1 + $0x38] sm:$0xff]
    %v36 = vld [vmem:[%s1 + $0x40] sm:$0xff]
    %v37 = vld [vmem:[%s1 + $0x48] sm:$0xff]
    %v38 = vld [vmem:[%s1 + $0x50] sm:$0xf]
    %v39 = vld [vmem:[%s2] sm:$0xff]
    %v40 = vld [vmem:[%s2 + $0x8] sm:$0xff]
    %v41 = vld [vmem:[%s2 + $0x10] sm:$0xff]
    %v42 = vld [vmem:[%s2 + $0x18] sm:$0xff]
    %v43 = vld [vmem:[%s2 + $0x20] sm:$0xff]
    %v44 = vld [vmem:[%s2 + $0x28] sm:$0xff]
    %v45 = vld [vmem:[%s2 + $0x30] sm:$0xff]
    %v46 = vld [vmem:[%s2 + $0x38] sm:$0xff]
    %v47 = vld [vmem:[%s2 + $0x40] sm:$0xff]
    %v48 = vld [vmem:[%s2 + $0x48] sm:$0xff]
    %v49 = vld [vmem:[%s2 + $0x50] sm:$0xf]
    %51 = vset.pattern.permute.xlu0 0
    %52 = vperm.xlu0 %51, %v39
    %v53 = vpop.permute.xlu0 %52
    %56 = vset.pattern.permute.xlu0 0
    %57 = vperm.xlu0 %56, %v40
    %v58 = vpop.permute.xlu0 %57
    %61 = vset.pattern.permute.xlu0 0
    %62 = vperm.xlu0 %61, %v41
    %v63 = vpop.permute.xlu0 %62
    %66 = vset.pattern.permute.xlu0 0
    %67 = vperm.xlu0 %66, %v42
    %v68 = vpop.permute.xlu0 %67
    %71 = vset.pattern.permute.xlu0 0
    %72 = vperm.xlu0 %71, %v43
    %v73 = vpop.permute.xlu0 %72
    %76 = vset.pattern.permute.xlu0 0
    %77 = vperm.xlu0 %76, %v44
    %v78 = vpop.permute.xlu0 %77
    %81 = vset.pattern.permute.xlu0 0
    %82 = vperm.xlu0 %81, %v45
    %v83 = vpop.permute.xlu0 %82
    %86 = vset.pattern.permute.xlu0 0
    %87 = vperm.xlu0 %86, %v46
    %v88 = vpop.permute.xlu0 %87
    %91 = vset.pattern.permute.xlu0 0
    %92 = vperm.xlu0 %91, %v47
    %v93 = vpop.permute.xlu0 %92
    %96 = vset.pattern.permute.xlu0 0
    %97 = vperm.xlu0 %96, %v48
    %v98 = vpop.permute.xlu0 %97
    %101 = vset.pattern.permute.xlu0 0
    %102 = vperm.xlu0 %101, %v49
    %v103 = vpop.permute.xlu0 %102
    %vm105 = vcmask 39936
    %v107 = vsel %vm105, %v28, 0
    %v110 = vsel %vm105, %v29, 0
    %v113 = vsel %vm105, %v30, 0
    %v116 = vsel %vm105, %v31, 0
    %v119 = vsel %vm105, %v32, 0
    %v122 = vsel %vm105, %v33, 0
    %v125 = vsel %vm105, %v34, 0
    %v128 = vsel %vm105, %v35, 0
    %v131 = vsel %vm105, %v36, 0
    %v134 = vsel %vm105, %v37, 0
    %v137 = vsel %vm105, %v38, 0
    %vm139 = vcmask 1044480
    %v141 = vsel %vm139, %v27, 0
    %143 = vmatprep.subr.mxu0 0.0
    %144 = vmatpush1.msra.mxu0 %v141
    %145 = vmatprep.subr.mxu0 0.0
    %146 = vmatpush1.msra.mxu0 0.0
    %147 = vmatprep.subr.mxu0 0.0
    %148 = vmatpush1.msra.mxu0 0.0
    %149 = vmatprep.subr.mxu0 0.0
    %150 = vmatpush1.msra.mxu0 0.0
    %151 = vmatprep.subr.mxu0 0.0
    %152 = vmatpush1.msra.mxu0 0.0
    %153 = vmatprep.subr.mxu0 0.0
    %154 = vmatpush1.msra.mxu0 0.0
    %155 = vmatprep.subr.mxu0 0.0
    %156 = vmatpush1.msra.mxu0 0.0
    %157 = vmatprep.subr.mxu0 0.0
    %158 = vmatpush1.msra.mxu0 0.0
    %159 = vmatprep.subr.mxu0 0.0
    %160 = vmatpush1.msra.mxu0 0.0
    %161 = vmatprep.subr.mxu0 0.0
    %162 = vmatpush1.msra.mxu0 0.0
    %163 = vmatprep.subr.mxu0 0.0
    %164 = vmatpush1.msra.mxu0 0.0
    %165 = vmatprep.subr.mxu0 0.0
    %166 = vmatpush1.msra.mxu0 0.0
    %167 = vmatprep.subr.mxu0 0.0
    %168 = vmatpush1.msra.mxu0 0.0
    %169 = vmatprep.subr.mxu0 0.0
    %170 = vmatpush1.msra.mxu0 0.0
    %171 = vmatprep.subr.mxu0 0.0
    %172 = vmatpush1.msra.mxu0 0.0
    %173 = vmatprep.subr.mxu0 0.0
    %174 = vmatpush1.msra.mxu0 0.0
    %175 = vmatprep.subr.mxu0 0.0
    %176 = vmatpush1.msra.mxu0 0.0
    %177 = vmatprep.subr.mxu0 0.0
    %178 = vmatpush1.msra.mxu0 0.0
    %179 = vmatprep.subr.mxu0 0.0
    %180 = vmatpush1.msra.mxu0 0.0
    %181 = vmatprep.subr.mxu0 0.0
    %182 = vmatpush1.msra.mxu0 0.0
    %183 = vmatprep.subr.mxu0 0.0
    %184 = vmatpush1.msra.mxu0 0.0
    %185 = vmatprep.subr.mxu0 0.0
    %186 = vmatpush1.msra.mxu0 0.0
    %187 = vmatprep.subr.mxu0 0.0
    %188 = vmatpush1.msra.mxu0 0.0
    %189 = vmatprep.subr.mxu0 0.0
    %190 = vmatpush1.msra.mxu0 0.0
    %191 = vmatprep.subr.mxu0 0.0
    %192 = vmatpush1.msra.mxu0 0.0
    %193 = vmatprep.subr.mxu0 0.0
    %194 = vmatpush1.msra.mxu0 0.0
    %195 = vmatprep.subr.mxu0 0.0
    %196 = vmatpush1.msra.mxu0 0.0
    %197 = vmatprep.subr.mxu0 0.0
    %198 = vmatpush1.msra.mxu0 0.0
    %199 = vmatprep.subr.mxu0 0.0
    %200 = vmatpush1.msra.mxu0 0.0
    %201 = vmatprep.subr.mxu0 0.0
    %202 = vmatpush1.msra.mxu0 0.0
    %203 = vmatprep.subr.mxu0 0.0
    %204 = vmatpush1.msra.mxu0 0.0
    %205 = vmatprep.subr.mxu0 0.0
    %206 = vmatpush1.msra.mxu0 0.0
    %207 = vmatprep.mubr.f32.mxu0 0.0
    %208 = vmatmul.mubr.f32.gmra.mrb[0].mxu0 %v107
    %v209 = vpop.f32.mrb[0].mxu0
    %v210 = vadd.f32 %v53, %v209
    %v211 = vpop.f32.mrb[0].mxu0
    %212 = vmatprep.mubr.f32.mxu0 0.0
    %213 = vmatmul.mubr.f32.gmra.mrb[0].mxu0 %v110
    %v214 = vpop.f32.mrb[0].mxu0
    %v215 = vadd.f32 %v58, %v214
    %v216 = vpop.f32.mrb[0].mxu0
    %217 = vmatprep.mubr.f32.mxu0 0.0
    %218 = vmatmul.mubr.f32.gmra.mrb[0].mxu0 %v113
    %v219 = vpop.f32.mrb[0].mxu0
    %v220 = vadd.f32 %v63, %v219
    %v221 = vpop.f32.mrb[0].mxu0
    %222 = vmatprep.mubr.f32.mxu0 0.0
    %223 = vmatmul.mubr.f32.gmra.mrb[0].mxu0 %v116
    %v224 = vpop.f32.mrb[0].mxu0
    %v225 = vadd.f32 %v68, %v224
    %v226 = vpop.f32.mrb[0].mxu0
    %227 = vmatprep.mubr.f32.mxu0 0.0
    %228 = vmatmul.mubr.f32.gmra.mrb[0].mxu0 %v119
    %v229 = vpop.f32.mrb[0].mxu0
    %v230 = vadd.f32 %v73, %v229
    %v231 = vpop.f32.mrb[0].mxu0
    %232 = vmatprep.mubr.f32.mxu0 0.0
    %233 = vmatmul.mubr.f32.gmra.mrb[0].mxu0 %v122
    %v234 = vpop.f32.mrb[0].mxu0
    %v235 = vadd.f32 %v78, %v234
    %v236 = vpop.f32.mrb[0].mxu0
    %237 = vmatprep.mubr.f32.mxu0 0.0
    %238 = vmatmul.mubr.f32.gmra.mrb[0].mxu0 %v125
    %v239 = vpop.f32.mrb[0].mxu0
    %v240 = vadd.f32 %v83, %v239
    %v241 = vpop.f32.mrb[0].mxu0
    %242 = vmatprep.mubr.f32.mxu0 0.0
    %243 = vmatmul.mubr.f32.gmra.mrb[0].mxu0 %v128
    %v244 = vpop.f32.mrb[0].mxu0
    %v245 = vadd.f32 %v88, %v244
    %v246 = vpop.f32.mrb[0].mxu0
    %247 = vmatprep.mubr.f32.mxu0 0.0
    %248 = vmatmul.mubr.f32.gmra.mrb[0].mxu0 %v131
    %v249 = vpop.f32.mrb[0].mxu0
    %v250 = vadd.f32 %v93, %v249
    %v251 = vpop.f32.mrb[0].mxu0
    %252 = vmatprep.mubr.f32.mxu0 0.0
    %253 = vmatmul.mubr.f32.gmra.mrb[0].mxu0 %v134
    %v254 = vpop.f32.mrb[0].mxu0
    %v255 = vadd.f32 %v98, %v254
    %v256 = vpop.f32.mrb[0].mxu0
    %257 = vmatprep.mubr.f32.mxu0 0.0
    %258 = vmatmul.mubr.f32.gmra.mrb[0].mxu0 %v137
    %v259 = vpop.f32.mrb[0].mxu0
    %v260 = vadd.f32 %v103, %v259
    %v261 = vpop.f32.mrb[0].mxu0
    %262 = vdwg.mxu0
    %v263 = vmax.f32 %v210, 0.0
    %v264 = vmax.f32 %v215, 0.0
    %v265 = vmax.f32 %v220, 0.0
    %v266 = vmax.f32 %v225, 0.0
    %v267 = vmax.f32 %v230, 0.0
    %v268 = vmax.f32 %v235, 0.0
    %v269 = vmax.f32 %v240, 0.0
    %v270 = vmax.f32 %v245, 0.0
    %v271 = vmax.f32 %v250, 0.0
    %v272 = vmax.f32 %v255, 0.0
    %v273 = vmax.f32 %v260, 0.0
    %v274 = vld [vmem:[%s3] sm:$0xff]
    %v275 = vld [vmem:[%s3 + $0x8] sm:$0xff]
    %v276 = vld [vmem:[%s3 + $0x10] sm:$0xff]
    %v277 = vld [vmem:[%s3 + $0x18] sm:$0xff]
    %v278 = vld [vmem:[%s3 + $0x20] sm:$0xff]
    %v279 = vld [vmem:[%s3 + $0x28] sm:$0xff]
    %v280 = vld [vmem:[%s3 + $0x30] sm:$0x3]
    %v281 = vld [vmem:[%s4] sm:$0xff]
    %v282 = vld [vmem:[%s4 + $0x8] sm:$0xff]
    %v283 = vld [vmem:[%s4 + $0x10] sm:$0xff]
    %v284 = vld [vmem:[%s4 + $0x18] sm:$0xff]
    %v285 = vld [vmem:[%s4 + $0x20] sm:$0xff]
    %v286 = vld [vmem:[%s4 + $0x28] sm:$0xff]
    %v287 = vld [vmem:[%s4 + $0x30] sm:$0x3]
    %289 = vset.pattern.permute.xlu0 0
    %290 = vperm.xlu0 %289, %v281
    %v291 = vpop.permute.xlu0 %290
    %294 = vset.pattern.permute.xlu0 0
    %295 = vperm.xlu0 %294, %v282
    %v296 = vpop.permute.xlu0 %295
    %299 = vset.pattern.permute.xlu0 0
    %300 = vperm.xlu0 %299, %v283
    %v301 = vpop.permute.xlu0 %300
    %304 = vset.pattern.permute.xlu0 0
    %305 = vperm.xlu0 %304, %v284
    %v306 = vpop.permute.xlu0 %305
    %309 = vset.pattern.permute.xlu0 0
    %310 = vperm.xlu0 %309, %v285
    %v311 = vpop.permute.xlu0 %310
    %314 = vset.pattern.permute.xlu0 0
    %315 = vperm.xlu0 %314, %v286
    %v316 = vpop.permute.xlu0 %315
    %319 = vset.pattern.permute.xlu0 0
    %320 = vperm.xlu0 %319, %v287
    %v321 = vpop.permute.xlu0 %320
    %vm323 = vcmask 687104
    %v325 = vsel %vm323, %v274, 0
    %v328 = vsel %vm323, %v275, 0
    %v331 = vsel %vm323, %v276, 0
    %v334 = vsel %vm323, %v277, 0
    %v337 = vsel %vm323, %v278, 0
    %v340 = vsel %vm323, %v279, 0
    %v343 = vsel %vm323, %v280, 0
    %vm345 = vcmask 1043456
    %v347 = vsel %vm345, %v273, 0
    %349 = vmatprep.subr.mxu0 0.0
    %350 = vmatpush1.msra.mxu0 %v263
    %351 = vmatprep.subr.mxu0 0.0
    %352 = vmatpush1.msra.mxu0 %v264
    %353 = vmatprep.subr.mxu0 0.0
    %354 = vmatpush1.msra.mxu0 %v265
    %355 = vmatprep.subr.mxu0 0.0
    %356 = vmatpush1.msra.mxu0 %v266
    %357 = vmatprep.subr.mxu0 0.0
    %358 = vmatpush1.msra.mxu0 %v267
    %359 = vmatprep.subr.mxu0 0.0
    %360 = vmatpush1.msra.mxu0 %v268
    %361 = vmatprep.subr.mxu0 0.0
    %362 = vmatpush1.msra.mxu0 %v269
    %363 = vmatprep.subr.mxu0 0.0
    %364 = vmatpush1.msra.mxu0 %v270
    %365 = vmatprep.subr.mxu0 0.0
    %366 = vmatpush1.msra.mxu0 %v271
    %367 = vmatprep.subr.mxu0 0.0
    %368 = vmatpush1.msra.mxu0 %v272
    %369 = vmatprep.subr.mxu0 0.0
    %370 = vmatpush1.msra.mxu0 %v347
    %371 = vmatprep.subr.mxu0 0.0
    %372 = vmatpush1.msra.mxu0 0.0
    %373 = vmatprep.subr.mxu0 0.0
    %374 = vmatpush1.msra.mxu0 0.0
    %375 = vmatprep.subr.mxu0 0.0
    %376 = vmatpush1.msra.mxu0 0.0
    %377 = vmatprep.subr.mxu0 0.0
    %378 = vmatpush1.msra.mxu0 0.0
    %379 = vmatprep.subr.mxu0 0.0
    %380 = vmatpush1.msra.mxu0 0.0
    %381 = vmatprep.subr.mxu0 0.0
    %382 = vmatpush1.msra.mxu0 0.0
    %383 = vmatprep.subr.mxu0 0.0
    %384 = vmatpush1.msra.mxu0 0.0
    %385 = vmatprep.subr.mxu0 0.0
    %386 = vmatpush1.msra.mxu0 0.0
    %387 = vmatprep.subr.mxu0 0.0
    %388 = vmatpush1.msra.mxu0 0.0
    %389 = vmatprep.subr.mxu0 0.0
    %390 = vmatpush1.msra.mxu0 0.0
    %391 = vmatprep.subr.mxu0 0.0
    %392 = vmatpush1.msra.mxu0 0.0
    %393 = vmatprep.subr.mxu0 0.0
    %394 = vmatpush1.msra.mxu0 0.0
    %395 = vmatprep.subr.mxu0 0.0
    %396 = vmatpush1.msra.mxu0 0.0
    %397 = vmatprep.subr.mxu0 0.0
    %398 = vmatpush1.msra.mxu0 0.0
    %399 = vmatprep.subr.mxu0 0.0
    %400 = vmatpush1.msra.mxu0 0.0
    %401 = vmatprep.subr.mxu0 0.0
    %402 = vmatpush1.msra.mxu0 0.0
    %403 = vmatprep.subr.mxu0 0.0
    %404 = vmatpush1.msra.mxu0 0.0
    %405 = vmatprep.subr.mxu0 0.0
    %406 = vmatpush1.msra.mxu0 0.0
    %407 = vmatprep.subr.mxu0 0.0
    %408 = vmatpush1.msra.mxu0 0.0
    %409 = vmatprep.subr.mxu0 0.0
    %410 = vmatpush1.msra.mxu0 0.0
    %411 = vmatprep.subr.mxu0 0.0
    %412 = vmatpush1.msra.mxu0 0.0
    %413 = vmatprep.mubr.f32.mxu0 0.0
    %414 = vmatmul.mubr.f32.gmra.mrb[0].mxu0 %v325
    %v415 = vpop.f32.mrb[0].mxu0
    %v416 = vadd.f32 %v291, %v415
    %v417 = vpop.f32.mrb[0].mxu0
    %418 = vmatprep.mubr.f32.mxu0 0.0
    %419 = vmatmul.mubr.f32.gmra.mrb[0].mxu0 %v328
    %v420 = vpop.f32.mrb[0].mxu0
    %v421 = vadd.f32 %v296, %v420
    %v422 = vpop.f32.mrb[0].mxu0
    %423 = vmatprep.mubr.f32.mxu0 0.0
    %424 = vmatmul.mubr.f32.gmra.mrb[0].mxu0 %v331
    %v425 = vpop.f32.mrb[0].mxu0
    %v426 = vadd.f32 %v301, %v425
    %v427 = vpop.f32.mrb[0].mxu0
    %428 = vmatprep.mubr.f32.mxu0 0.0
    %429 = vmatmul.mubr.f32.gmra.mrb[0].mxu0 %v334
    %v430 = vpop.f32.mrb[0].mxu0
    %v431 = vadd.f32 %v306, %v430
    %v432 = vpop.f32.mrb[0].mxu0
    %433 = vmatprep.mubr.f32.mxu0 0.0
    %434 = vmatmul.mubr.f32.gmra.mrb[0].mxu0 %v337
    %v435 = vpop.f32.mrb[0].mxu0
    %v436 = vadd.f32 %v311, %v435
    %v437 = vpop.f32.mrb[0].mxu0
    %438 = vmatprep.mubr.f32.mxu0 0.0
    %439 = vmatmul.mubr.f32.gmra.mrb[0].mxu0 %v340
    %v440 = vpop.f32.mrb[0].mxu0
    %v441 = vadd.f32 %v316, %v440
    %v442 = vpop.f32.mrb[0].mxu0
    %443 = vmatprep.mubr.f32.mxu0 0.0
    %444 = vmatmul.mubr.f32.gmra.mrb[0].mxu0 %v343
    %v445 = vpop.f32.mrb[0].mxu0
    %v446 = vadd.f32 %v321, %v445
    %v447 = vpop.f32.mrb[0].mxu0
    %448 = vdwg.mxu0
    %v449 = vmax.f32 %v416, 0.0
    %v450 = vmax.f32 %v421, 0.0
    %v451 = vmax.f32 %v426, 0.0
    %v452 = vmax.f32 %v431, 0.0
    %v453 = vmax.f32 %v436, 0.0
    %v454 = vmax.f32 %v441, 0.0
    %v455 = vmax.f32 %v446, 0.0
    %v456 = vld [vmem:[%s5] sm:$0xff]
    %v457 = vld [vmem:[%s5 + $0x8] sm:$0x1f]
    %v458 = vld [vmem:[%s6] sm:$0xff]
    %v459 = vld [vmem:[%s6 + $0x8] sm:$0x1f]
    %461 = vset.pattern.permute.xlu0 0
    %462 = vperm.xlu0 %461, %v458
    %v463 = vpop.permute.xlu0 %462
    %466 = vset.pattern.permute.xlu0 0
    %467 = vperm.xlu0 %466, %v459
    %v468 = vpop.permute.xlu0 %467
    %vm470 = vcmask 408576
    %v472 = vsel %vm470, %v456, 0
    %v475 = vsel %vm470, %v457, 0
    %vm477 = vcmask 1041408
    %v479 = vsel %vm477, %v455, 0
    %481 = vmatprep.subr.mxu0 0.0
    %482 = vmatpush1.msra.mxu0 %v449
    %483 = vmatprep.subr.mxu0 0.0
    %484 = vmatpush1.msra.mxu0 %v450
    %485 = vmatprep.subr.mxu0 0.0
    %486 = vmatpush1.msra.mxu0 %v451
    %487 = vmatprep.subr.mxu0 0.0
    %488 = vmatpush1.msra.mxu0 %v452
    %489 = vmatprep.subr.mxu0 0.0
    %490 = vmatpush1.msra.mxu0 %v453
    %491 = vmatprep.subr.mxu0 0.0
    %492 = vmatpush1.msra.mxu0 %v454
    %493 = vmatprep.subr.mxu0 0.0
    %494 = vmatpush1.msra.mxu0 %v479
    %495 = vmatprep.subr.mxu0 0.0
    %496 = vmatpush1.msra.mxu0 0.0
    %497 = vmatprep.subr.mxu0 0.0
    %498 = vmatpush1.msra.mxu0 0.0
    %499 = vmatprep.subr.mxu0 0.0
    %500 = vmatpush1.msra.mxu0 0.0
    %501 = vmatprep.subr.mxu0 0.0
    %502 = vmatpush1.msra.mxu0 0.0
    %503 = vmatprep.subr.mxu0 0.0
    %504 = vmatpush1.msra.mxu0 0.0
    %505 = vmatprep.subr.mxu0 0.0
    %506 = vmatpush1.msra.mxu0 0.0
    %507 = vmatprep.subr.mxu0 0.0
    %508 = vmatpush1.msra.mxu0 0.0
    %509 = vmatprep.subr.mxu0 0.0
    %510 = vmatpush1.msra.mxu0 0.0
    %511 = vmatprep.subr.mxu0 0.0
    %512 = vmatpush1.msra.mxu0 0.0
    %513 = vmatprep.subr.mxu0 0.0
    %514 = vmatpush1.msra.mxu0 0.0
    %515 = vmatprep.subr.mxu0 0.0
    %516 = vmatpush1.msra.mxu0 0.0
    %517 = vmatprep.subr.mxu0 0.0
    %518 = vmatpush1.msra.mxu0 0.0
    %519 = vmatprep.subr.mxu0 0.0
    %520 = vmatpush1.msra.mxu0 0.0
    %521 = vmatprep.subr.mxu0 0.0
    %522 = vmatpush1.msra.mxu0 0.0
    %523 = vmatprep.subr.mxu0 0.0
    %524 = vmatpush1.msra.mxu0 0.0
    %525 = vmatprep.subr.mxu0 0.0
    %526 = vmatpush1.msra.mxu0 0.0
    %527 = vmatprep.subr.mxu0 0.0
    %528 = vmatpush1.msra.mxu0 0.0
    %529 = vmatprep.subr.mxu0 0.0
    %530 = vmatpush1.msra.mxu0 0.0
    %531 = vmatprep.subr.mxu0 0.0
    %532 = vmatpush1.msra.mxu0 0.0
    %533 = vmatprep.subr.mxu0 0.0
    %534 = vmatpush1.msra.mxu0 0.0
    %535 = vmatprep.subr.mxu0 0.0
    %536 = vmatpush1.msra.mxu0 0.0
    %537 = vmatprep.subr.mxu0 0.0
    %538 = vmatpush1.msra.mxu0 0.0
    %539 = vmatprep.subr.mxu0 0.0
    %540 = vmatpush1.msra.mxu0 0.0
    %541 = vmatprep.subr.mxu0 0.0
    %542 = vmatpush1.msra.mxu0 0.0
    %543 = vmatprep.subr.mxu0 0.0
    %544 = vmatpush1.msra.mxu0 0.0
    %545 = vmatprep.mubr.f32.mxu0 0.0
    %546 = vmatmul.mubr.f32.gmra.mrb[0].mxu0 %v472
    %v547 = vpop.f32.mrb[0].mxu0
    %v548 = vadd.f32 %v463, %v547
    %v549 = vpop.f32.mrb[0].mxu0
    %550 = vmatprep.mubr.f32.mxu0 0.0
    %551 = vmatmul.mubr.f32.gmra.mrb[0].mxu0 %v475
    %v552 = vpop.f32.mrb[0].mxu0
    %v553 = vadd.f32 %v468, %v552
    %v554 = vpop.f32.mrb[0].mxu0
    %555 = vdwg.mxu0
    %556 = vst [vmem:[#allocation2] sm:$0xff] %v548
    %557 = vst [vmem:[#allocation2 + $0x8] sm:$0x1f] %v553
    // Predicated region
    $region30: #{tpu_custom_call.1} parent=1 // pred_check
      _
    $region31: #{tpu_custom_call.1} parent=1 // pred_check_branch
      %559 = sbr.rel (0) target = $region33
    $region32: #{tpu_custom_call.1} parent=1 // pred_region
      %s561 = ssub.s32 256, 256
      %562 = vsyncadd [#allocation3], %s561
      %s563 = sshll.u32 [#allocation2], 4
      %s564 = int_to_ptr.vmem [resolvable:$true] %s563
      %569 = dma.vmem_to_hbm [thread:$0]  %s564, 256, %s7, [#allocation3], 128, 128, 8
    $region33: #{tpu_custom_call.1} parent=1 // pred_fallthru
      _
    // Predicated region
    $region34: #{tpu_custom_call.1} parent=1 // pred_check
      _
    $region35: #{tpu_custom_call.1} parent=1 // pred_check_branch
      %571 = sbr.rel (0) target = $region37
    $region36: #{tpu_custom_call.1} parent=1 // pred_region
      %572 = dma.done [#allocation3], 256
    $region37: #{tpu_custom_call.1} parent=1 // pred_fallthru
      _
    %573 = vsyncpa [#allocation3], 1

</llo_original>
